<compile_context>
chip_gen: v6e
topology: v6e:2x2x1
jax: 0.10.0
libtpu: 0.0.40
codegen_flags: <defaults>
</compile_context>

<pallas_src>
import jax
import jax.numpy as jnp
from jax.experimental import pallas as pl
from jax.experimental.pallas import tpu as pltpu


def _round_up(x, m):
    return (x + m - 1) // m * m


# ---------------------------------------------------------------------------
# Fast path: table resident in VMEM, gather via one-hot matmul on the MXU.
# ---------------------------------------------------------------------------
def _vmem_onehot_kernel(ids_ref, table_ref, out_ref):
    ids = ids_ref[...]                          # (T, 1) int32 token ids
    t_blk = ids.shape[0]
    vocab_pad = table_ref.shape[0]              # multiple of 128 (lane dense)
    vocab_iota = jax.lax.broadcasted_iota(jnp.int32, (t_blk, vocab_pad), 1)
    one_hot = (vocab_iota == ids).astype(table_ref.dtype)      # (T, Vpad)
    out_ref[...] = jnp.dot(
        one_hot, table_ref[...], preferred_element_type=jnp.float32
    ).astype(out_ref.dtype)


def _embedding_vmem(flat_idx, table, block_tokens):
    n = flat_idx.shape[0]
    vocab, dim = table.shape
    itemsize = table.dtype.itemsize

    # Lane-pad vocab to a multiple of 128 so the one-hot compare/select is
    # fully lane-dense and the table sublane dim is aligned.  Padded rows are
    # never selected (ids were clamped to vocab-1 in the wrapper).
    vocab_pad = _round_up(vocab, 128)
    if vocab_pad != vocab:
        table = jnp.pad(table, ((0, vocab_pad - vocab), (0, 0)))

    # Tokens per grid step: multiple of 8, as large as the VMEM budget allows.
    t_blk = max(8, min(_round_up(block_tokens, 8), _round_up(n, 8)))

    def vmem_use(t):
        return (2 * t * 4                              # ids blocks (dbl-buffered)
                + 2 * t * dim * itemsize               # output blocks
                + 2 * vocab_pad * dim * itemsize       # resident table buffers
                + 2 * t * vocab_pad * 4)               # iota + one-hot temporaries

    while t_blk > 8 and vmem_use(t_blk) > 12 * 1024 * 1024:
        t_blk = _round_up(t_blk // 2, 8)

    n_pad = _round_up(n, t_blk)
    grid = (n_pad // t_blk,)
    idx_pad = jnp.pad(flat_idx, (0, n_pad - n)).reshape(n_pad, 1)

    out = pl.pallas_call(
        _vmem_onehot_kernel,
        grid_spec=pltpu.PrefetchScalarGridSpec(
            num_scalar_prefetch=0,
            grid=grid,
            in_specs=[
                pl.BlockSpec((t_blk, 1), lambda i: (i, 0)),        # ids tile
                pl.BlockSpec((vocab_pad, dim), lambda i: (0, 0)),  # resident table
            ],
            out_specs=pl.BlockSpec((t_blk, dim), lambda i: (i, 0)),
        ),
        out_shape=jax.ShapeDtypeStruct((n_pad, dim), table.dtype),
        compiler_params=pltpu.CompilerParams(
            dimension_semantics=("parallel",)),
    )(idx_pad, table)
    return out[:n]


# ---------------------------------------------------------------------------
# Fallback path: table stays in HBM; batched manual row-gather DMAs.
# ---------------------------------------------------------------------------
def _make_hbm_gather_kernel(t_blk):
    def kernel(idx_ref, table_hbm, out_ref, row_buf, sems):
        base = pl.program_id(0) * t_blk
        # Issue all T row-gather DMAs so the DMA engine keeps them in flight.
        for t in range(t_blk):
            pltpu.make_async_copy(
                table_hbm.at[idx_ref[base + t]], row_buf.at[t], sems.at[t]
            ).start()
        # Wait for all of them (static-index src: wait only needs size + sem).
        for t in range(t_blk):
            pltpu.make_async_copy(
                table_hbm.at[0], row_buf.at[t], sems.at[t]
            ).wait()
        # One dense, lane-aligned (T, D) store instead of T masked row stores.
        out_ref[...] = row_buf[...]
    return kernel


def _embedding_hbm_gather(flat_idx, table, block_tokens):
    n = flat_idx.shape[0]
    _, dim = table.shape
    itemsize = table.dtype.itemsize

    t_blk = max(8, min(_round_up(block_tokens, 8), _round_up(n, 8)))
    # row_buf + double-buffered output block must fit the scoped VMEM budget.
    while t_blk > 8 and 3 * t_blk * dim * itemsize > 12 * 1024 * 1024:
        t_blk = _round_up(t_blk // 2, 8)

    n_pad = _round_up(n, t_blk)
    grid = (n_pad // t_blk,)
    idx_pad = jnp.pad(flat_idx, (0, n_pad - n))

    out = pl.pallas_call(
        _make_hbm_gather_kernel(t_blk),
        grid_spec=pltpu.PrefetchScalarGridSpec(
            num_scalar_prefetch=1,                                # ids -> SMEM
            grid=grid,
            in_specs=[pl.BlockSpec(memory_space=pl.ANY)],         # table in HBM
            out_specs=pl.BlockSpec((t_blk, dim), lambda i, idx: (i, 0)),
            scratch_shapes=[
                pltpu.VMEM((t_blk, dim), table.dtype),
                pltpu.SemaphoreType.DMA((t_blk,)),
            ],
        ),
        out_shape=jax.ShapeDtypeStruct((n_pad, dim), table.dtype),
        compiler_params=pltpu.CompilerParams(
            dimension_semantics=("parallel",)),
    )(idx_pad, table)
    return out[:n]


# ---------------------------------------------------------------------------
# Public wrapper (matches Embedding.forward semantics).
# ---------------------------------------------------------------------------
def embedding_lookup(x, table, *, block_tokens=256, force_hbm_gather=False):
    """Pallas embedding lookup.

    x:     integer array of token ids, any shape.
    table: (vocab_size, embed_dim) embedding weights.
    returns: x.shape + (embed_dim,) embeddings, dtype of `table`.
    """
    vocab, dim = table.shape
    flat_idx = jnp.clip(x.reshape(-1).astype(jnp.int32), 0, vocab - 1)
    if flat_idx.shape[0] == 0:
        return jnp.zeros(x.shape + (dim,), table.dtype)

    table_pad_bytes = _round_up(vocab, 128) * dim * table.dtype.itemsize
    if (not force_hbm_gather) and table_pad_bytes <= 4 * 1024 * 1024:
        out_flat = _embedding_vmem(flat_idx, table, block_tokens)
    else:
        out_flat = _embedding_hbm_gather(flat_idx, table,
                                         min(block_tokens, 128))
    return out_flat.reshape(x.shape + (dim,))


if __name__ == "__main__":
    vocab_size = 64
    embed_dim = 128   # lane-aligned embedding width
    B, S = 2, 8

    key = jax.random.PRNGKey(0)
    k_tab, k_idx = jax.random.split(key)

    # nn.Embedding default init: weights ~ N(0, 1)
    table = jax.random.normal(k_tab, (vocab_size, embed_dim), dtype=jnp.float32)
    x = jax.random.randint(k_idx, (B, S), 0, vocab_size, dtype=jnp.int32)

    ref = jnp.take(table, x, axis=0)

    # Fast path: VMEM-resident (lane-padded) table, one-hot MXU gather.
    out = jax.block_until_ready(embedding_lookup(x, table))
    assert out.shape == (B, S, embed_dim), out.shape
    assert out.dtype == jnp.float32, out.dtype
    assert jnp.allclose(out, ref), "VMEM-resident path mismatch vs reference"

    # Fallback path (used for tables too large for VMEM): batched HBM gather.
    out_hbm = jax.block_until_ready(
        embedding_lookup(x, table, force_hbm_gather=True))
    assert out_hbm.shape == (B, S, embed_dim), out_hbm.shape
    assert jnp.allclose(out_hbm, ref), "HBM gather path mismatch vs reference"

    print("KERNEL_OK")
</pallas_src>

<mosaic_0001>
module attributes {stable_mosaic.version = 11 : i64} {
  func.func @_vmem_onehot_kernel(%arg0: i32, %arg1: memref<16x1xi32, #tpu.memory_space<vmem>>, %arg2: memref<128x128xf32, #tpu.memory_space<vmem>>, %arg3: memref<16x128xf32, #tpu.memory_space<vmem>>) attributes {dimension_semantics = [#tpu.dimension_semantics<parallel>], iteration_bounds = array<i64: 1>, scalar_prefetch = 0 : i64, scratch_operands = 0 : i64, tpu.core_type = #tpu.core_type<tc>, window_params = [{transform_indices = @transform_0, window_bounds = array<i64: 16, 1>}, {pipeline_mode = #tpu.pipeline_mode<synchronous>, transform_indices = @transform_1, window_bounds = array<i64: 128, 128>}, {transform_indices = @transform_2, window_bounds = array<i64: 16, 128>}]} {
    %c0 = arith.constant 0 : index
    %c0_0 = arith.constant 0 : index
    %0 = vector.load %arg1[%c0, %c0_0] : memref<16x1xi32, #tpu.memory_space<vmem>>, vector<16x1xi32>
    %1 = tpu.iota {dimensions = array<i32: 1>} : vector<16x128xi32>
    %2 = vector.broadcast %0 : vector<16x1xi32> to vector<16x128xi32>
    %3 = arith.cmpi eq, %1, %2 : vector<16x128xi32>
    %4 = arith.extui %3 : vector<16x128xi1> to vector<16x128xi32>
    %5 = arith.sitofp %4 : vector<16x128xi32> to vector<16x128xf32>
    %c0_1 = arith.constant 0 : index
    %c0_2 = arith.constant 0 : index
    %6 = vector.load %arg2[%c0_1, %c0_2] : memref<128x128xf32, #tpu.memory_space<vmem>>, vector<128x128xf32>
    %cst = arith.constant dense<0.000000e+00> : vector<16x128xf32>
    %7 = tpu.matmul %5, %6, %cst {dimension_numbers = #tpu.dot_dimension_numbers<[1], [0], [0], [1], [0, 0, 1, 1], [], []>} : vector<16x128xf32>, vector<128x128xf32>, vector<16x128xf32> -> vector<16x128xf32>
    %c0_3 = arith.constant 0 : index
    %c0_4 = arith.constant 0 : index
    %8 = vector.load %arg3[%c0_3, %c0_4] : memref<16x128xf32, #tpu.memory_space<vmem>>, vector<16x128xf32>
    tpu.vector_store %arg3[%c0_3, %c0_4], %7 {strides = array<i32>} : memref<16x128xf32, #tpu.memory_space<vmem>>, vector<16x128xf32>,
    return
  }
  func.func @transform_0(%arg0: i32) -> (i32, i32) {
    %c0_i32 = arith.constant 0 : i32
    %c0_i32_0 = arith.constant 0 : i32
    return %arg0, %c0_i32 : i32, i32
  }
  func.func @transform_1(%arg0: i32) -> (i32, i32) {
    %c0_i32 = arith.constant 0 : i32
    %c0_i32_0 = arith.constant 0 : i32
    %c0_i32_1 = arith.constant 0 : i32
    return %c0_i32, %c0_i32_0 : i32, i32
  }
  func.func @transform_2(%arg0: i32) -> (i32, i32) {
    %c0_i32 = arith.constant 0 : i32
    %c0_i32_0 = arith.constant 0 : i32
    return %arg0, %c0_i32 : i32, i32
  }
}

</mosaic_0001>

<llo_original>
// kernel: tpu_custom_call.1
$region0: #{tpu_custom_call.1}
  #allocation0 [shape = 'u32[]', space=smem, size = 0x4, offset = 0x4, fixed_abs, tag = 'smem constant byte address 0x4 - core index']
  #allocation1 [shape = 'u32[144,128]{1,0:T(1,128)}', space=vmem, size = 0x12000, scoped, tag = 'internal scratch']
  %s0 = inlined_call_operand.vmem [shape: s32[16,1], index: 0, kind: input, shape index: {}]
  %s1 = inlined_call_operand.hbm [shape: f32[128,128], index: 1, kind: input, shape index: {}]
  %s2 = inlined_call_operand.hbm [shape: f32[16,128], index: 2, kind: output, shape index: {}]
  %s3 = sld [smem:[#allocation0]]
  $region22: #{tpu_custom_call.1} parent=0
    _
  %s5 = ssub.s32 1, %s3
  %s6 = scalar_select 0, %s5, %s3
  $region1: #{tpu_custom_call.1} parent=0
    #allocation2 [shape = 'u8[65536]{0}', space=vmem, size = 0x10000, scoped, tag = 'input window, operand 1, single buffered']
    #allocation3 [shape = 's32[1]{0}', space=sflag, size = 0x4, scoped, tag = 'scoped memory for tpu_custom_call.1']
    #allocation4 [shape = 's32[1]{0}', space=sflag, size = 0x4, scoped, tag = 'scoped memory for tpu_custom_call.1']
    #allocation5 [shape = 'u8[8192]{0}', space=vmem, size = 0x2000, scoped, tag = 'output window, operand 0, single buffered']
    %7 = vsyncpa [#allocation3], 0
    %8 = vsyncpa [#allocation4], 0
    // Predicated region
    $region2: #{tpu_custom_call.1} parent=1 // pred_check
      _
    $region3: #{tpu_custom_call.1} parent=1 // pred_check_branch
      %10 = sbr.rel (0) target = $region5
    $region4: #{tpu_custom_call.1} parent=1 // pred_region
      _
    $region5: #{tpu_custom_call.1} parent=1 // pred_fallthru
      _
    // Predicated region
    $region6: #{tpu_custom_call.1} parent=1 // pred_check
      _
    $region7: #{tpu_custom_call.1} parent=1 // pred_check_branch
      %12 = sbr.rel (0) target = $region9
    $region8: #{tpu_custom_call.1} parent=1 // pred_region
      %s14 = ssub.s32 2048, 2048
      %15 = vsyncadd [#allocation3], %s14
      %s16 = sshll.u32 [#allocation2], 4
      %s17 = int_to_ptr.vmem [resolvable:$true] %s16
      %22 = dma.hbm_to_vmem [thread:$0]  %s1, 2048, %s17, [#allocation3], 128, 128, 8
    $region9: #{tpu_custom_call.1} parent=1 // pred_fallthru
      _
    // Predicated region
    $region10: #{tpu_custom_call.1} parent=1 // pred_check
      _
    $region11: #{tpu_custom_call.1} parent=1 // pred_check_branch
      %24 = sbr.rel (0) target = $region13
    $region12: #{tpu_custom_call.1} parent=1 // pred_region
      %25 = dma.done [#allocation3], 2048
    $region13: #{tpu_custom_call.1} parent=1 // pred_fallthru
      _
    %v26 = vld [vmem:[%s0] sm:$0xff]
    %v27 = vld [vmem:[%s0 + $0x8] sm:$0xff]
    %v28 = vlaneseq
    %v29 = vand.u32 %v28, 127
    %30 = vset.pattern.permute.xlu0 0
    %31 = vperm.xlu0 %30, %v26
    %v32 = vpop.permute.xlu0 %31
    %33 = vset.pattern.permute.xlu0 0
    %34 = vperm.xlu0 %33, %v27
    %v35 = vpop.permute.xlu0 %34
    %vm36 = vcmp.eq.s32.totalorder %v29, %v32
    %vm37 = vcmp.eq.s32.totalorder %v29, %v35
    %v38 = vsel %vm36, 1, 0
    %v39 = vsel %vm37, 1, 0
    %v40 = vcvt.s32.f32 %v38
    %v41 = vcvt.s32.f32 %v39
    %v42 = vld [vmem:[#allocation2] sm:$0xff]
    %v43 = vld [vmem:[#allocation2 + $0x8] sm:$0xff]
    %v44 = vld [vmem:[#allocation2 + $0x10] sm:$0xff]
    %v45 = vld [vmem:[#allocation2 + $0x18] sm:$0xff]
    %v46 = vld [vmem:[#allocation2 + $0x20] sm:$0xff]
    %v47 = vld [vmem:[#allocation2 + $0x28] sm:$0xff]
    %v48 = vld [vmem:[#allocation2 + $0x30] sm:$0xff]
    %v49 = vld [vmem:[#allocation2 + $0x38] sm:$0xff]
    %v50 = vld [vmem:[#allocation2 + $0x40] sm:$0xff]
    %v51 = vld [vmem:[#allocation2 + $0x48] sm:$0xff]
    %v52 = vld [vmem:[#allocation2 + $0x50] sm:$0xff]
    %v53 = vld [vmem:[#allocation2 + $0x58] sm:$0xff]
    %v54 = vld [vmem:[#allocation2 + $0x60] sm:$0xff]
    %v55 = vld [vmem:[#allocation2 + $0x68] sm:$0xff]
    %v56 = vld [vmem:[#allocation2 + $0x70] sm:$0xff]
    %v57 = vld [vmem:[#allocation2 + $0x78] sm:$0xff]
    %58 = vmatprep.subr.mxu0 0.0
    %59 = vmatpush1.msra.mxu0 %v57
    %60 = vmatprep.subr.mxu0 0.0
    %61 = vmatpush1.msra.mxu0 %v56
    %62 = vmatprep.subr.mxu0 0.0
    %63 = vmatpush1.msra.mxu0 %v55
    %64 = vmatprep.subr.mxu0 0.0
    %65 = vmatpush1.msra.mxu0 %v54
    %66 = vmatprep.subr.mxu0 0.0
    %67 = vmatpush1.msra.mxu0 %v53
    %68 = vmatprep.subr.mxu0 0.0
    %69 = vmatpush1.msra.mxu0 %v52
    %70 = vmatprep.subr.mxu0 0.0
    %71 = vmatpush1.msra.mxu0 %v51
    %72 = vmatprep.subr.mxu0 0.0
    %73 = vmatpush1.msra.mxu0 %v50
    %74 = vmatprep.subr.mxu0 0.0
    %75 = vmatpush1.msra.mxu0 %v49
    %76 = vmatprep.subr.mxu0 0.0
    %77 = vmatpush1.msra.mxu0 %v48
    %78 = vmatprep.subr.mxu0 0.0
    %79 = vmatpush1.msra.mxu0 %v47
    %80 = vmatprep.subr.mxu0 0.0
    %81 = vmatpush1.msra.mxu0 %v46
    %82 = vmatprep.subr.mxu0 0.0
    %83 = vmatpush1.msra.mxu0 %v45
    %84 = vmatprep.subr.mxu0 0.0
    %85 = vmatpush1.msra.mxu0 %v44
    %86 = vmatprep.subr.mxu0 0.0
    %87 = vmatpush1.msra.mxu0 %v43
    %88 = vmatprep.subr.mxu0 0.0
    %89 = vmatpush1.msra.mxu0 %v42
    %90 = vmatprep.subr.mxu0 0.0
    %91 = vmatpush2.msra.mxu0 0.0
    %92 = vmatprep.subr.mxu0 0.0
    %93 = vmatpush2.msra.mxu0 0.0
    %94 = vmatprep.subr.mxu0 0.0
    %95 = vmatpush2.msra.mxu0 0.0
    %96 = vmatprep.subr.mxu0 0.0
    %97 = vmatpush2.msra.mxu0 0.0
    %98 = vmatprep.subr.mxu0 0.0
    %99 = vmatpush2.msra.mxu0 0.0
    %100 = vmatprep.subr.mxu0 0.0
    %101 = vmatpush2.msra.mxu0 0.0
    %102 = vmatprep.subr.mxu0 0.0
    %103 = vmatpush2.msra.mxu0 0.0
    %104 = vmatprep.subr.mxu0 0.0
    %105 = vmatpush2.msra.mxu0 0.0
    %106 = vmatprep.subr.mxu0 0.0
    %107 = vmatpush2.msra.mxu0 0.0
    %108 = vmatprep.subr.mxu0 0.0
    %109 = vmatpush2.msra.mxu0 0.0
    %110 = vmatprep.subr.mxu0 0.0
    %111 = vmatpush2.msra.mxu0 0.0
    %112 = vmatprep.subr.mxu0 0.0
    %113 = vmatpush2.msra.mxu0 0.0
    %114 = vmatprep.subr.mxu0 0.0
    %115 = vmatpush2.msra.mxu0 0.0
    %116 = vmatprep.subr.mxu0 0.0
    %117 = vmatpush2.msra.mxu0 0.0
    %118 = vmatprep.subr.mxu0 0.0
    %119 = vmatpush2.msra.mxu0 0.0
    %120 = vmatprep.subr.mxu0 0.0
    %121 = vmatpush2.msra.mxu0 0.0
    %122 = vmatprep.mubr.f32.mxu0 0.0
    %123 = vmatmul.mubr.f32.gmra.mxu0 %v40
    %v124 = vpop.f32.mrf.mxu0
    %v125 = vadd.f32 0.0, %v124
    %v126 = vpop.f32.mrf.mxu0
    %127 = vmatprep.mubr.f32.mxu0 0.0
    %128 = vmatmul.mubr.f32.gmra.mxu0 %v41
    %v129 = vpop.f32.mrf.mxu0
    %v130 = vadd.f32 0.0, %v129
    %v131 = vpop.f32.mrf.mxu0
    %132 = vdwg.mxu0
    %133 = vst [vmem:[#allocation5] sm:$0xff] %v125
    %134 = vst [vmem:[#allocation5 + $0x8] sm:$0xff] %v130
    // Predicated region
    $region14: #{tpu_custom_call.1} parent=1 // pred_check
      _
    $region15: #{tpu_custom_call.1} parent=1 // pred_check_branch
      %136 = sbr.rel (0) target = $region17
    $region16: #{tpu_custom_call.1} parent=1 // pred_region
      %s138 = ssub.s32 256, 256
      %139 = vsyncadd [#allocation4], %s138
      %s140 = sshll.u32 [#allocation5], 4
      %s141 = int_to_ptr.vmem [resolvable:$true] %s140
      %146 = dma.vmem_to_hbm [thread:$0]  %s141, 256, %s2, [#allocation4], 128, 128, 8
    $region17: #{tpu_custom_call.1} parent=1 // pred_fallthru
      _
    // Predicated region
    $region18: #{tpu_custom_call.1} parent=1 // pred_check
      _
    $region19: #{tpu_custom_call.1} parent=1 // pred_check_branch
      %148 = sbr.rel (0) target = $region21
    $region20: #{tpu_custom_call.1} parent=1 // pred_region
      %149 = dma.done [#allocation4], 256
    $region21: #{tpu_custom_call.1} parent=1 // pred_fallthru
      _
    %150 = vsyncpa [#allocation3], 1
    %151 = vsyncpa [#allocation4], 1

</llo_original>
